<compile_context>
chip_gen: v6e
topology: v6e:2x2x1
jax: 0.10.0
libtpu: 0.0.40
codegen_flags: <defaults>
</compile_context>

<pallas_src>
import math
import jax
import jax.numpy as jnp
import numpy as np
from jax.experimental import pallas as pl
from jax.experimental.pallas import tpu as pltpu

EPS = 1e-12  # matches F.normalize default eps

_LANE = 128
_TARGET_X_TILE_BYTES = 4 << 20   # per (single) x tile: pipelining sweet spot
_PAD_FRACTION = 0.25             # lane-pad out_c only if it inflates writes <= 25%


# ----------------------------- kernels --------------------------------------


def _norm_kernel(x_ref, o_ref):
    x = x_ref[...].astype(jnp.float32)                  # accurate norm for bf16
    ssq = jnp.sum(x * x, axis=1, keepdims=True)
    inv = jax.lax.rsqrt(jnp.maximum(ssq, EPS * EPS))    # == 1 / max(||x||, eps)
    o_ref[...] = (x * inv).astype(o_ref.dtype)


def _proj_norm_kernel(x_ref, w_ref, b_ref, o_ref):
    # y = x @ W + b : native dtypes into the MXU, f32 accumulation.
    y = jnp.dot(x_ref[...], w_ref[...], preferred_element_type=jnp.float32)
    y = y + b_ref[...].astype(jnp.float32)
    ssq = jnp.sum(y * y, axis=1, keepdims=True)
    inv = jax.lax.rsqrt(jnp.maximum(ssq, EPS * EPS))
    o_ref[...] = (y * inv).astype(o_ref.dtype)


def _proj_norm_ktiled_kernel(x_ref, w_ref, b_ref, o_ref, acc_ref):
    # K-tiled matmul for large weights: f32 accumulator, finalize on last K step.
    k = pl.program_id(1)

    @pl.when(k == 0)
    def _():
        acc_ref[...] = jnp.zeros_like(acc_ref)

    acc_ref[...] += jnp.dot(x_ref[...], w_ref[...],
                            preferred_element_type=jnp.float32)

    @pl.when(k == pl.num_programs(1) - 1)
    def _():
        y = acc_ref[...] + b_ref[...].astype(jnp.float32)
        ssq = jnp.sum(y * y, axis=1, keepdims=True)
        inv = jax.lax.rsqrt(jnp.maximum(ssq, EPS * EPS))
        o_ref[...] = (y * inv).astype(o_ref.dtype)


# ----------------------------- wrapper ---------------------------------------


def _round_up(a, m):
    return (a + m - 1) // m * m


def _cdiv(a, b):
    return (a + b - 1) // b


def _vmem_capacity_bytes():
    # 128 MiB on v5e/v6e, 64 MiB per TensorCore on v7x.
    try:
        return int(pltpu.get_tpu_info().vmem_capacity_bytes)
    except Exception:
        return 64 << 20  # conservative (v7x) if the query is unavailable


def proposal_proj_forward(x, params=None, *, if_proj=False,
                          ktile_weight_bytes=8 << 20):
    """Forward pass of ProposalProj.

    x:      (N, in_c)
    params: (w, b) with w: (in_c, out_c), b: (out_c,) -- only when if_proj.
    """
    N, C = x.shape
    dtype = x.dtype
    in_b = jnp.dtype(dtype).itemsize
    if in_b not in (1, 2, 4):
        raise ValueError(f"unsupported input dtype {dtype}")
    sub = 32 // in_b        # sublane packing: f32 -> 8, bf16 -> 16, int8/fp8 -> 32

    # --- generation-aware VMEM budget + explicit scoped limit -----------------
    physical = _vmem_capacity_bytes()
    vmem_limit = min(int(physical * 3) // 4, physical - (8 << 20))
    budget = vmem_limit - (4 << 20)              # headroom for compiler scratch

    if if_proj:
        if params is None:
            raise ValueError("if_proj=True requires params=(w, b)")
        w, b = params
        if w.shape[0] != C:
            raise ValueError("weight must be pre-transposed to (in_c, out_c)")
        out_c = w.shape[1]
        w_b = jnp.dtype(w.dtype).itemsize

        # Lane-dense stores only when the padding overhead is modest; padding a
        # tiny out_c (e.g. 16 -> 128) would inflate output HBM traffic 8x.
        out_cp = _round_up(out_c, _LANE)
        do_pad = (out_cp != out_c) and (out_cp - out_c) <= _PAD_FRACTION * out_c
        out_cu = out_cp if do_pad else out_c
        if do_pad:
            w = jnp.pad(w, ((0, 0), (0, out_cu - out_c)))
            b = jnp.pad(b, ((0, out_cu - out_c),))
        b2d = b.reshape(1, out_cu)

        # K-tile the contraction only when keeping the whole weight resident
        # would eat a meaningful share of VMEM (and C tiles cleanly by 128).
        weight_bytes = C * out_cu * w_b
        use_ktile = weight_bytes > ktile_weight_bytes and C % _LANE == 0
        tk = next(t for t in (512, 384, 256, 128) if C % t == 0) if use_ktile else C

        # Per-row VMEM: 2x x-tile + 2x out-tile + f32 intermediate/accumulator.
        per_row = (2 * tk * in_b + 2 * out_cu * in_b
                   + (2 if use_ktile else 1) * 4 * out_cu)
        # Resident: weight (counted at 2 buffers to stay conservative) + bias.
        resident = 2 * tk * out_cu * w_b + out_cu * w_b
    else:
        out_c = out_cu = C
        do_pad = False
        use_ktile = False
        tk = C
        per_row = 2 * C * in_b + 2 * C * in_b + 4 * C      # x, out, f32 temp
        resident = 0

    # --- row tile --------------------------------------------------------------
    tm = _round_up(max(_TARGET_X_TILE_BYTES // max(1, tk * in_b), sub), sub)
    tm = min(tm, _round_up(N, sub))                 # never exceed the input
    if N >= 2048:                                   # >= 2 steps so both v7x TCs work
        tm = min(tm, _round_up(_cdiv(N, 2), sub))
    while tm > sub and resident + tm * per_row > budget:
        tm = _round_up(max(tm // 2, sub), sub)
    need = resident + tm * per_row
    if need > budget:
        # tm bottomed out (very large C / out_c): raise the scoped limit toward
        # the physical capacity rather than silently relying on the compiler.
        vmem_limit = min(need + (8 << 20), physical - (4 << 20))

    # Partial last row block is masked by Pallas; all math here is row-local, so
    # the garbage rows of a partial block never influence valid output rows.
    grid_m = _cdiv(N, tm)

    if not if_proj:
        return pl.pallas_call(
            _norm_kernel,
            out_shape=jax.ShapeDtypeStruct((N, C), dtype),
            grid_spec=pltpu.PrefetchScalarGridSpec(
                num_scalar_prefetch=0,
                grid=(grid_m,),
                in_specs=[pl.BlockSpec((tm, C), lambda i: (i, 0))],
                out_specs=pl.BlockSpec((tm, C), lambda i: (i, 0)),
            ),
            compiler_params=pltpu.CompilerParams(
                dimension_semantics=("parallel",),
                vmem_limit_bytes=int(vmem_limit)),
        )(x)

    if use_ktile:
        kt = C // tk
        y = pl.pallas_call(
            _proj_norm_ktiled_kernel,
            out_shape=jax.ShapeDtypeStruct((N, out_cu), dtype),
            grid_spec=pltpu.PrefetchScalarGridSpec(
                num_scalar_prefetch=0,
                grid=(grid_m, kt),
                in_specs=[
                    pl.BlockSpec((tm, tk), lambda i, k: (i, k)),       # x K-slab
                    pl.BlockSpec((tk, out_cu), lambda i, k: (k, 0)),   # weight K-slab
                    pl.BlockSpec((1, out_cu), lambda i, k: (0, 0)),    # bias
                ],
                out_specs=pl.BlockSpec((tm, out_cu), lambda i, k: (i, 0)),
                scratch_shapes=[pltpu.VMEM((tm, out_cu), jnp.float32)],
            ),
            compiler_params=pltpu.CompilerParams(
                dimension_semantics=("parallel", "arbitrary"),
                vmem_limit_bytes=int(vmem_limit)),
        )(x, w, b2d)
    else:
        def _run(single_buffer_resident):
            # The weight/bias index_maps are grid-invariant: one VMEM buffer is
            # enough, which halves their footprint and frees budget for rows.
            mode = ({"pipeline_mode": pl.Buffered(1)}
                    if single_buffer_resident else {})
            return pl.pallas_call(
                _proj_norm_kernel,
                out_shape=jax.ShapeDtypeStruct((N, out_cu), dtype),
                grid_spec=pltpu.PrefetchScalarGridSpec(
                    num_scalar_prefetch=0,
                    grid=(grid_m,),
                    in_specs=[
                        pl.BlockSpec((tm, C), lambda i: (i, 0)),            # x rows
                        pl.BlockSpec((C, out_cu), lambda i: (0, 0), **mode),  # weight
                        pl.BlockSpec((1, out_cu), lambda i: (0, 0), **mode),  # bias
                    ],
                    out_specs=pl.BlockSpec((tm, out_cu), lambda i: (i, 0)),
                ),
                compiler_params=pltpu.CompilerParams(
                    dimension_semantics=("parallel",),
                    vmem_limit_bytes=int(vmem_limit)),
            )(x, w, b2d)

        try:
            y = _run(True)
        except Exception:
            # pipeline_mode=pl.Buffered(1) unsupported on this jax build; fall
            # back to default double buffering (budget already accounts for it).
            y = _run(False)

    return y[:, :out_c] if do_pad else y


# ----------------------------- init / reference ------------------------------


def init_proposal_proj_params(key, in_c, out_c):
    """Deterministic init mimicking nn.Linear defaults (kaiming-uniform bounds)."""
    kw, kb = jax.random.split(key)
    bound = 1.0 / math.sqrt(in_c)
    # PyTorch stores weight as (out_c, in_c); we keep the transposed (in_c, out_c).
    w = jax.random.uniform(kw, (in_c, out_c), jnp.float32, -bound, bound)
    b = jax.random.uniform(kb, (out_c,), jnp.float32, -bound, bound)
    return w, b


def _np64(a):
    return np.asarray(jnp.asarray(a, jnp.float32), dtype=np.float64)


def _reference(x, params, if_proj):
    y = _np64(x)
    if if_proj:
        w, b = params
        y = y @ _np64(w) + _np64(b)
    nrm = np.maximum(np.linalg.norm(y, axis=1, keepdims=True), EPS)
    return y / nrm


if __name__ == "__main__":
    key = jax.random.PRNGKey(0)
    kx, kp, kx2, kp2, kx3, kp3 = jax.random.split(key, 6)

    # Shapes consistent with the module: x is (N, in_c), default out_c = in_c // 2.
    N, in_c = 10, 32               # N deliberately not a multiple of 8 (tail handling)
    out_c = in_c // 2

    x = jax.random.normal(kx, (N, in_c), dtype=jnp.float32)
    w, b = init_proposal_proj_params(kp, in_c, out_c)

    # 1) if_proj=True: Linear + normalize(dim=1)  (true out_c=16, masked stores)
    y = proposal_proj_forward(x, (w, b), if_proj=True)
    jax.block_until_ready(y)
    np.testing.assert_allclose(_np64(y), _reference(x, (w, b), True),
                               rtol=1e-4, atol=1e-4)

    # 2) if_proj=False: normalize(dim=1) only
    y = proposal_proj_forward(x, if_proj=False)
    jax.block_until_ready(y)
    np.testing.assert_allclose(_np64(y), _reference(x, None, False),
                               rtol=1e-5, atol=1e-5)

    # 3) bf16 path: native bf16 into the MXU with f32 accumulation.
    xb, wb, bb = x.astype(jnp.bfloat16), w.astype(jnp.bfloat16), b.astype(jnp.bfloat16)
    y = proposal_proj_forward(xb, (wb, bb), if_proj=True)
    jax.block_until_ready(y)
    np.testing.assert_allclose(_np64(y), _reference(xb, (wb, bb), True),
                               rtol=2e-2, atol=2e-2)

    # 4) Conditional lane-pad path (out_c=120 -> 128, 6.7% inflation -> padded).
    x4 = jax.random.normal(kx2, (16, 64), dtype=jnp.float32)
    w4, b4 = init_proposal_proj_params(kp2, 64, 120)
    y = proposal_proj_forward(x4, (w4, b4), if_proj=True)
    jax.block_until_ready(y)
    np.testing.assert_allclose(_np64(y), _reference(x4, (w4, b4), True),
                               rtol=1e-4, atol=1e-4)

    # 5) K-tiled matmul path (forced by a tiny weight-size threshold; kt = 2).
    x5 = jax.random.normal(kx3, (64, 1024), dtype=jnp.float32)
    w5, b5 = init_proposal_proj_params(kp3, 1024, 128)
    y = proposal_proj_forward(x5, (w5, b5), if_proj=True, ktile_weight_bytes=0)
    jax.block_until_ready(y)
    np.testing.assert_allclose(_np64(y), _reference(x5, (w5, b5), True),
                               rtol=1e-3, atol=1e-3)

    print("KERNEL_OK")
</pallas_src>

<mosaic_0001>
module attributes {stable_mosaic.version = 11 : i64} {
  func.func @_proj_norm_kernel(%arg0: i32, %arg1: memref<16x32xf32, #tpu.memory_space<vmem>>, %arg2: memref<32x16xf32, #tpu.memory_space<vmem>>, %arg3: memref<1x16xf32, #tpu.memory_space<vmem>>, %arg4: memref<16x16xf32, #tpu.memory_space<vmem>>) attributes {dimension_semantics = [#tpu.dimension_semantics<parallel>], iteration_bounds = array<i64: 1>, scalar_prefetch = 0 : i64, scratch_operands = 0 : i64, tpu.core_type = #tpu.core_type<tc>, window_params = [{transform_indices = @transform_0, window_bounds = array<i64: 16, 32>}, {pipeline_mode = #tpu.pipeline_mode<synchronous>, transform_indices = @transform_1, window_bounds = array<i64: 32, 16>}, {pipeline_mode = #tpu.pipeline_mode<synchronous>, transform_indices = @transform_2, window_bounds = array<i64: 1, 16>}, {transform_indices = @transform_3, window_bounds = array<i64: 16, 16>}]} {
    %c0 = arith.constant 0 : index
    %c0_0 = arith.constant 0 : index
    %0 = vector.load %arg1[%c0, %c0_0] : memref<16x32xf32, #tpu.memory_space<vmem>>, vector<16x32xf32>
    %c0_1 = arith.constant 0 : index
    %c0_2 = arith.constant 0 : index
    %1 = vector.load %arg2[%c0_1, %c0_2] : memref<32x16xf32, #tpu.memory_space<vmem>>, vector<32x16xf32>
    %cst = arith.constant dense<0.000000e+00> : vector<16x16xf32>
    %2 = tpu.matmul %0, %1, %cst {dimension_numbers = #tpu.dot_dimension_numbers<[1], [0], [0], [1], [0, 0, 1, 1], [], []>} : vector<16x32xf32>, vector<32x16xf32>, vector<16x16xf32> -> vector<16x16xf32>
    %c0_3 = arith.constant 0 : index
    %c0_4 = arith.constant 0 : index
    %3 = vector.load %arg3[%c0_3, %c0_4] : memref<1x16xf32, #tpu.memory_space<vmem>>, vector<1x16xf32>
    %4 = vector.broadcast %3 : vector<1x16xf32> to vector<16x16xf32>
    %5 = arith.addf %2, %4 : vector<16x16xf32>
    %6 = arith.mulf %5, %5 : vector<16x16xf32>
    %cst_5 = arith.constant dense<0.000000e+00> : vector<16xf32>
    %7 = vector.multi_reduction <add>, %6, %cst_5 [1] : vector<16x16xf32> to vector<16xf32>
    %8 = vector.shape_cast %7 : vector<16xf32> to vector<16x1xf32>
    %cst_6 = arith.constant 1.000000e-24 : f32
    %9 = vector.broadcast %cst_6 : f32 to vector<16x1xf32>
    %10 = arith.maximumf %8, %9 : vector<16x1xf32>
    %11 = math.rsqrt %10 : vector<16x1xf32>
    %12 = vector.broadcast %11 : vector<16x1xf32> to vector<16x16xf32>
    %13 = arith.mulf %5, %12 : vector<16x16xf32>
    %c0_7 = arith.constant 0 : index
    %c0_8 = arith.constant 0 : index
    %14 = vector.load %arg4[%c0_7, %c0_8] : memref<16x16xf32, #tpu.memory_space<vmem>>, vector<16x16xf32>
    tpu.vector_store %arg4[%c0_7, %c0_8], %13 {strides = array<i32>} : memref<16x16xf32, #tpu.memory_space<vmem>>, vector<16x16xf32>,
    return
  }
  func.func @transform_0(%arg0: i32) -> (i32, i32) {
    %c0_i32 = arith.constant 0 : i32
    %c0_i32_0 = arith.constant 0 : i32
    return %arg0, %c0_i32 : i32, i32
  }
  func.func @transform_1(%arg0: i32) -> (i32, i32) {
    %c0_i32 = arith.constant 0 : i32
    %c0_i32_0 = arith.constant 0 : i32
    %c0_i32_1 = arith.constant 0 : i32
    return %c0_i32, %c0_i32_0 : i32, i32
  }
  func.func @transform_2(%arg0: i32) -> (i32, i32) {
    %c0_i32 = arith.constant 0 : i32
    %c0_i32_0 = arith.constant 0 : i32
    %c0_i32_1 = arith.constant 0 : i32
    return %c0_i32, %c0_i32_0 : i32, i32
  }
  func.func @transform_3(%arg0: i32) -> (i32, i32) {
    %c0_i32 = arith.constant 0 : i32
    %c0_i32_0 = arith.constant 0 : i32
    return %arg0, %c0_i32 : i32, i32
  }
}

module attributes {stable_mosaic.version = 11 : i64} {
  func.func @_proj_norm_kernel(%arg0: i32, %arg1: memref<16x32xf32, #tpu.memory_space<vmem>>, %arg2: memref<32x16xf32, #tpu.memory_space<vmem>>, %arg3: memref<1x16xf32, #tpu.memory_space<vmem>>, %arg4: memref<16x16xf32, #tpu.memory_space<vmem>>) attributes {dimension_semantics = [#tpu.dimension_semantics<parallel>], iteration_bounds = array<i64: 1>, scalar_prefetch = 0 : i64, scratch_operands = 0 : i64, tpu.core_type = #tpu.core_type<tc>, window_params = [{transform_indices = @transform_0, window_bounds = array<i64: 16, 32>}, {pipeline_mode = #tpu.pipeline_mode<synchronous>, transform_indices = @transform_1, window_bounds = array<i64: 32, 16>}, {pipeline_mode = #tpu.pipeline_mode<synchronous>, transform_indices = @transform_2, window_bounds = array<i64: 1, 16>}, {transform_indices = @transform_3, window_bounds = array<i64: 16, 16>}]} {
    %c0 = arith.constant 0 : index
    %c0_0 = arith.constant 0 : index
    %0 = vector.load %arg1[%c0, %c0_0] : memref<16x32xf32, #tpu.memory_space<vmem>>, vector<16x32xf32>
    %c0_1 = arith.constant 0 : index
    %c0_2 = arith.constant 0 : index
    %1 = vector.load %arg2[%c0_1, %c0_2] : memref<32x16xf32, #tpu.memory_space<vmem>>, vector<32x16xf32>
    %cst = arith.constant dense<0.000000e+00> : vector<16x16xf32>
    %2 = tpu.matmul %0, %1, %cst {dimension_numbers = #tpu.dot_dimension_numbers<[1], [0], [0], [1], [0, 0, 1, 1], [], []>} : vector<16x32xf32>, vector<32x16xf32>, vector<16x16xf32> -> vector<16x16xf32>
    %c0_3 = arith.constant 0 : index
    %c0_4 = arith.constant 0 : index
    %3 = vector.load %arg3[%c0_3, %c0_4] : memref<1x16xf32, #tpu.memory_space<vmem>>, vector<1x16xf32>
    %4 = vector.broadcast %3 : vector<1x16xf32> to vector<16x16xf32>
    %5 = arith.addf %2, %4 : vector<16x16xf32>
    %6 = arith.mulf %5, %5 : vector<16x16xf32>
    %cst_5 = arith.constant dense<0.000000e+00> : vector<16xf32>
    %7 = vector.multi_reduction <add>, %6, %cst_5 [1] : vector<16x16xf32> to vector<16xf32>
    %8 = vector.shape_cast %7 : vector<16xf32> to vector<16x1xf32>
    %cst_6 = arith.constant 1.000000e-24 : f32
    %9 = vector.broadcast %cst_6 : f32 to vector<16x1xf32>
    %10 = arith.maximumf %8, %9 : vector<16x1xf32>
    %11 = math.rsqrt %10 : vector<16x1xf32>
    %12 = vector.broadcast %11 : vector<16x1xf32> to vector<16x16xf32>
    %13 = arith.mulf %5, %12 : vector<16x16xf32>
    %c0_7 = arith.constant 0 : index
    %c0_8 = arith.constant 0 : index
    %14 = vector.load %arg4[%c0_7, %c0_8] : memref<16x16xf32, #tpu.memory_space<vmem>>, vector<16x16xf32>
    tpu.vector_store %arg4[%c0_7, %c0_8], %13 {strides = array<i32>} : memref<16x16xf32, #tpu.memory_space<vmem>>, vector<16x16xf32>,
    return
  }
  func.func @transform_0(%arg0: i32) -> (i32, i32) {
    %c0_i32 = arith.constant 0 : i32
    %c0_i32_0 = arith.constant 0 : i32
    return %arg0, %c0_i32 : i32, i32
  }
  func.func @transform_1(%arg0: i32) -> (i32, i32) {
    %c0_i32 = arith.constant 0 : i32
    %c0_i32_0 = arith.constant 0 : i32
    %c0_i32_1 = arith.constant 0 : i32
    return %c0_i32, %c0_i32_0 : i32, i32
  }
  func.func @transform_2(%arg0: i32) -> (i32, i32) {
    %c0_i32 = arith.constant 0 : i32
    %c0_i32_0 = arith.constant 0 : i32
    %c0_i32_1 = arith.constant 0 : i32
    return %c0_i32, %c0_i32_0 : i32, i32
  }
  func.func @transform_3(%arg0: i32) -> (i32, i32) {
    %c0_i32 = arith.constant 0 : i32
    %c0_i32_0 = arith.constant 0 : i32
    return %arg0, %c0_i32 : i32, i32
  }
}

</mosaic_0001>

<llo_original>
// kernel: tpu_custom_call.1
$region0: #{tpu_custom_call.1}
  #allocation0 [shape = 'u32[]', space=smem, size = 0x4, offset = 0x4, fixed_abs, tag = 'smem constant byte address 0x4 - core index']
  #allocation1 [shape = 'u32[144,128]{1,0:T(1,128)}', space=vmem, size = 0x12000, scoped, tag = 'internal scratch']
  %s0 = inlined_call_operand.vmem [shape: f32[10,32], index: 0, kind: input, shape index: {}]
  %s1 = inlined_call_operand.vmem [shape: f32[32,16], index: 1, kind: input, shape index: {}]
  %s2 = inlined_call_operand.vmem [shape: f32[1,16], index: 2, kind: input, shape index: {}]
  %s3 = inlined_call_operand.hbm [shape: f32[10,16], index: 3, kind: output, shape index: {}]
  %s4 = sld [smem:[#allocation0]]
  $region22: #{tpu_custom_call.1} parent=0
    _
  %s6 = ssub.s32 1, %s4
  %s7 = scalar_select 0, %s6, %s4
  $region1: #{tpu_custom_call.1} parent=0
    #allocation2 [shape = 'u8[8192]{0}', space=vmem, size = 0x2000, scoped, tag = 'output window, operand 0, single buffered']
    #allocation3 [shape = 's32[1]{0}', space=sflag, size = 0x4, scoped, tag = 'scoped memory for tpu_custom_call.1']
    %8 = vsyncpa [#allocation3], 0
    // Predicated region
    $region2: #{tpu_custom_call.1} parent=1 // pred_check
      _
    $region3: #{tpu_custom_call.1} parent=1 // pred_check_branch
      %10 = sbr.rel (0) target = $region5
    $region4: #{tpu_custom_call.1} parent=1 // pred_region
      _
    $region5: #{tpu_custom_call.1} parent=1 // pred_fallthru
      _
    // Predicated region
    $region6: #{tpu_custom_call.1} parent=1 // pred_check
      _
    $region7: #{tpu_custom_call.1} parent=1 // pred_check_branch
      %12 = sbr.rel (0) target = $region9
    $region8: #{tpu_custom_call.1} parent=1 // pred_region
      _
    $region9: #{tpu_custom_call.1} parent=1 // pred_fallthru
      _
    // Predicated region
    $region10: #{tpu_custom_call.1} parent=1 // pred_check
      _
    $region11: #{tpu_custom_call.1} parent=1 // pred_check_branch
      %14 = sbr.rel (0) target = $region13
    $region12: #{tpu_custom_call.1} parent=1 // pred_region
      _
    $region13: #{tpu_custom_call.1} parent=1 // pred_fallthru
      _
    %v15 = vld [vmem:[%s0] sm:$0xff]
    %v16 = vld [vmem:[%s0 + $0x8] sm:$0xff]
    %v17 = vld [vmem:[%s1] sm:$0xff]
    %v18 = vld [vmem:[%s1 + $0x8] sm:$0xff]
    %v19 = vld [vmem:[%s1 + $0x10] sm:$0xff]
    %v20 = vld [vmem:[%s1 + $0x18] sm:$0xff]
    %v21 = vld [vmem:[%s2] sm:$0x1]
    %v23 = vlaneseq
    %v24 = vshrl.u32 %v23, 7
    %v25 = vsub.s32 0, %v24
    %v26 = vrot.slane %v21, %v25
    %vm28 = vcmask 261120
    %v30 = vsel %vm28, %v15, 0
    %v33 = vsel %vm28, %v16, 0
    %35 = vmatprep.subr.mxu0 0.0
    %36 = vmatpush1.msra.mxu0 0.0
    %37 = vmatprep.subr.mxu0 0.0
    %38 = vmatpush1.msra.mxu0 0.0
    %39 = vmatprep.subr.mxu0 0.0
    %40 = vmatpush1.msra.mxu0 0.0
    %41 = vmatprep.subr.mxu0 0.0
    %42 = vmatpush1.msra.mxu0 0.0
    %43 = vmatprep.subr.mxu0 0.0
    %44 = vmatpush1.msra.mxu0 0.0
    %45 = vmatprep.subr.mxu0 0.0
    %46 = vmatpush1.msra.mxu0 0.0
    %47 = vmatprep.subr.mxu0 0.0
    %48 = vmatpush1.msra.mxu0 0.0
    %49 = vmatprep.subr.mxu0 0.0
    %50 = vmatpush1.msra.mxu0 0.0
    %51 = vmatprep.subr.mxu0 0.0
    %52 = vmatpush1.msra.mxu0 0.0
    %53 = vmatprep.subr.mxu0 0.0
    %54 = vmatpush1.msra.mxu0 0.0
    %55 = vmatprep.subr.mxu0 0.0
    %56 = vmatpush1.msra.mxu0 0.0
    %57 = vmatprep.subr.mxu0 0.0
    %58 = vmatpush1.msra.mxu0 0.0
    %59 = vmatprep.subr.mxu0 0.0
    %60 = vmatpush1.msra.mxu0 %v20
    %61 = vmatprep.subr.mxu0 0.0
    %62 = vmatpush1.msra.mxu0 %v19
    %63 = vmatprep.subr.mxu0 0.0
    %64 = vmatpush1.msra.mxu0 %v18
    %65 = vmatprep.subr.mxu0 0.0
    %66 = vmatpush1.msra.mxu0 %v17
    %67 = vmatprep.subr.mxu0 0.0
    %68 = vmatpush2.msra.mxu0 0.0
    %69 = vmatprep.subr.mxu0 0.0
    %70 = vmatpush2.msra.mxu0 0.0
    %71 = vmatprep.subr.mxu0 0.0
    %72 = vmatpush2.msra.mxu0 0.0
    %73 = vmatprep.subr.mxu0 0.0
    %74 = vmatpush2.msra.mxu0 0.0
    %75 = vmatprep.subr.mxu0 0.0
    %76 = vmatpush2.msra.mxu0 0.0
    %77 = vmatprep.subr.mxu0 0.0
    %78 = vmatpush2.msra.mxu0 0.0
    %79 = vmatprep.subr.mxu0 0.0
    %80 = vmatpush2.msra.mxu0 0.0
    %81 = vmatprep.subr.mxu0 0.0
    %82 = vmatpush2.msra.mxu0 0.0
    %83 = vmatprep.subr.mxu0 0.0
    %84 = vmatpush2.msra.mxu0 0.0
    %85 = vmatprep.subr.mxu0 0.0
    %86 = vmatpush2.msra.mxu0 0.0
    %87 = vmatprep.subr.mxu0 0.0
    %88 = vmatpush2.msra.mxu0 0.0
    %89 = vmatprep.subr.mxu0 0.0
    %90 = vmatpush2.msra.mxu0 0.0
    %91 = vmatprep.subr.mxu0 0.0
    %92 = vmatpush2.msra.mxu0 0.0
    %93 = vmatprep.subr.mxu0 0.0
    %94 = vmatpush2.msra.mxu0 0.0
    %95 = vmatprep.subr.mxu0 0.0
    %96 = vmatpush2.msra.mxu0 0.0
    %97 = vmatprep.subr.mxu0 0.0
    %98 = vmatpush2.msra.mxu0 0.0
    %99 = vmatprep.mubr.f32.mxu0 0.0
    %100 = vmatmul.mubr.f32.gmra.mxu0 %v30
    %v101 = vpop.f32.mrf.mxu0
    %v102 = vadd.f32 %v26, %v101
    %v103 = vpop.f32.mrf.mxu0
    %104 = vmatprep.mubr.f32.mxu0 0.0
    %105 = vmatmul.mubr.f32.gmra.mxu0 %v33
    %v106 = vpop.f32.mrf.mxu0
    %v107 = vadd.f32 %v26, %v106
    %v108 = vpop.f32.mrf.mxu0
    %109 = vdwg.mxu0
    %v110 = vmul.f32 %v102, %v102
    %v111 = vmul.f32 %v107, %v107
    %vm112 = vcmask 130048
    %v113 = vsel %vm112, %v110, 0.0
    %114 = vadd.xlane.f32.xlu0 %v113
    %v115 = vpop.xlane.xlu0 %114
    %v116 = vsel %vm112, %v111, 0.0
    %117 = vadd.xlane.f32.xlu0 %v116
    %v118 = vpop.xlane.xlu0 %117
    %v119 = vmax.f32 %v115, 1e-24
    %v120 = vmax.f32 %v118, 1e-24
    %v121 = vrsqrt.pop %v119
    %v122 = vrsqrt.pop %v120
    %v123 = vmul.f32 %v102, %v121
    %v124 = vmul.f32 %v107, %v122
    %125 = vst.msk [vmem:[#allocation2] sm:$0xff] %vm112, %v123
    %126 = vst.msk [vmem:[#allocation2 + $0x8] sm:$0xff] %vm112, %v124
    // Predicated region
    $region14: #{tpu_custom_call.1} parent=1 // pred_check
      _
    $region15: #{tpu_custom_call.1} parent=1 // pred_check_branch
      %128 = sbr.rel (0) target = $region17
    $region16: #{tpu_custom_call.1} parent=1 // pred_region
      %s130 = ssub.s32 256, 256
      %131 = vsyncadd [#allocation3], %s130
      %s132 = sshll.u32 [#allocation2], 4
      %s133 = int_to_ptr.vmem [resolvable:$true] %s132
      %138 = dma.vmem_to_hbm [thread:$0]  %s133, 256, %s3, [#allocation3], 128, 128, 8
    $region17: #{tpu_custom_call.1} parent=1 // pred_fallthru
      _
    // Predicated region
    $region18: #{tpu_custom_call.1} parent=1 // pred_check
      _
    $region19: #{tpu_custom_call.1} parent=1 // pred_check_branch
      %140 = sbr.rel (0) target = $region21
    $region20: #{tpu_custom_call.1} parent=1 // pred_region
      %141 = dma.done [#allocation3], 256
    $region21: #{tpu_custom_call.1} parent=1 // pred_fallthru
      _
    %142 = vsyncpa [#allocation3], 1

// kernel: tpu_custom_call.1
$region0: #{tpu_custom_call.1}
  #allocation0 [shape = 'u32[]', space=smem, size = 0x4, offset = 0x4, fixed_abs, tag = 'smem constant byte address 0x4 - core index']
  #allocation1 [shape = 'u32[144,128]{1,0:T(1,128)}', space=vmem, size = 0x12000, scoped, tag = 'internal scratch']
  %s0 = inlined_call_operand.vmem [shape: f32[10,32], index: 0, kind: input, shape index: {}]
  %s1 = inlined_call_operand.vmem [shape: f32[32,16], index: 1, kind: input, shape index: {}]
  %s2 = inlined_call_operand.vmem [shape: f32[1,16], index: 2, kind: input, shape index: {}]
  %s3 = inlined_call_operand.hbm [shape: f32[10,16], index: 3, kind: output, shape index: {}]
  %s4 = sld [smem:[#allocation0]]
  $region22: #{tpu_custom_call.1} parent=0
    _
  %s6 = ssub.s32 1, %s4
  %s7 = scalar_select 0, %s6, %s4
  $region1: #{tpu_custom_call.1} parent=0
    #allocation2 [shape = 'u8[8192]{0}', space=vmem, size = 0x2000, scoped, tag = 'output window, operand 0, single buffered']
    #allocation3 [shape = 's32[1]{0}', space=sflag, size = 0x4, scoped, tag = 'scoped memory for tpu_custom_call.1']
    %8 = vsyncpa [#allocation3], 0
    // Predicated region
    $region2: #{tpu_custom_call.1} parent=1 // pred_check
      _
    $region3: #{tpu_custom_call.1} parent=1 // pred_check_branch
      %10 = sbr.rel (0) target = $region5
    $region4: #{tpu_custom_call.1} parent=1 // pred_region
      _
    $region5: #{tpu_custom_call.1} parent=1 // pred_fallthru
      _
    // Predicated region
    $region6: #{tpu_custom_call.1} parent=1 // pred_check
      _
    $region7: #{tpu_custom_call.1} parent=1 // pred_check_branch
      %12 = sbr.rel (0) target = $region9
    $region8: #{tpu_custom_call.1} parent=1 // pred_region
      _
    $region9: #{tpu_custom_call.1} parent=1 // pred_fallthru
      _
    // Predicated region
    $region10: #{tpu_custom_call.1} parent=1 // pred_check
      _
    $region11: #{tpu_custom_call.1} parent=1 // pred_check_branch
      %14 = sbr.rel (0) target = $region13
    $region12: #{tpu_custom_call.1} parent=1 // pred_region
      _
    $region13: #{tpu_custom_call.1} parent=1 // pred_fallthru
      _
    %v15 = vld [vmem:[%s0] sm:$0xff]
    %v16 = vld [vmem:[%s0 + $0x8] sm:$0xff]
    %v17 = vld [vmem:[%s1] sm:$0xff]
    %v18 = vld [vmem:[%s1 + $0x8] sm:$0xff]
    %v19 = vld [vmem:[%s1 + $0x10] sm:$0xff]
    %v20 = vld [vmem:[%s1 + $0x18] sm:$0xff]
    %v21 = vld [vmem:[%s2] sm:$0x1]
    %v23 = vlaneseq
    %v24 = vshrl.u32 %v23, 7
    %v25 = vsub.s32 0, %v24
    %v26 = vrot.slane %v21, %v25
    %vm28 = vcmask 261120
    %v30 = vsel %vm28, %v15, 0
    %v33 = vsel %vm28, %v16, 0
    %35 = vmatprep.subr.mxu0 0.0
    %36 = vmatpush1.msra.mxu0 0.0
    %37 = vmatprep.subr.mxu0 0.0
    %38 = vmatpush1.msra.mxu0 0.0
    %39 = vmatprep.subr.mxu0 0.0
    %40 = vmatpush1.msra.mxu0 0.0
    %41 = vmatprep.subr.mxu0 0.0
    %42 = vmatpush1.msra.mxu0 0.0
    %43 = vmatprep.subr.mxu0 0.0
    %44 = vmatpush1.msra.mxu0 0.0
    %45 = vmatprep.subr.mxu0 0.0
    %46 = vmatpush1.msra.mxu0 0.0
    %47 = vmatprep.subr.mxu0 0.0
    %48 = vmatpush1.msra.mxu0 0.0
    %49 = vmatprep.subr.mxu0 0.0
    %50 = vmatpush1.msra.mxu0 0.0
    %51 = vmatprep.subr.mxu0 0.0
    %52 = vmatpush1.msra.mxu0 0.0
    %53 = vmatprep.subr.mxu0 0.0
    %54 = vmatpush1.msra.mxu0 0.0
    %55 = vmatprep.subr.mxu0 0.0
    %56 = vmatpush1.msra.mxu0 0.0
    %57 = vmatprep.subr.mxu0 0.0
    %58 = vmatpush1.msra.mxu0 0.0
    %59 = vmatprep.subr.mxu0 0.0
    %60 = vmatpush1.msra.mxu0 %v20
    %61 = vmatprep.subr.mxu0 0.0
    %62 = vmatpush1.msra.mxu0 %v19
    %63 = vmatprep.subr.mxu0 0.0
    %64 = vmatpush1.msra.mxu0 %v18
    %65 = vmatprep.subr.mxu0 0.0
    %66 = vmatpush1.msra.mxu0 %v17
    %67 = vmatprep.subr.mxu0 0.0
    %68 = vmatpush2.msra.mxu0 0.0
    %69 = vmatprep.subr.mxu0 0.0
    %70 = vmatpush2.msra.mxu0 0.0
    %71 = vmatprep.subr.mxu0 0.0
    %72 = vmatpush2.msra.mxu0 0.0
    %73 = vmatprep.subr.mxu0 0.0
    %74 = vmatpush2.msra.mxu0 0.0
    %75 = vmatprep.subr.mxu0 0.0
    %76 = vmatpush2.msra.mxu0 0.0
    %77 = vmatprep.subr.mxu0 0.0
    %78 = vmatpush2.msra.mxu0 0.0
    %79 = vmatprep.subr.mxu0 0.0
    %80 = vmatpush2.msra.mxu0 0.0
    %81 = vmatprep.subr.mxu0 0.0
    %82 = vmatpush2.msra.mxu0 0.0
    %83 = vmatprep.subr.mxu0 0.0
    %84 = vmatpush2.msra.mxu0 0.0
    %85 = vmatprep.subr.mxu0 0.0
    %86 = vmatpush2.msra.mxu0 0.0
    %87 = vmatprep.subr.mxu0 0.0
    %88 = vmatpush2.msra.mxu0 0.0
    %89 = vmatprep.subr.mxu0 0.0
    %90 = vmatpush2.msra.mxu0 0.0
    %91 = vmatprep.subr.mxu0 0.0
    %92 = vmatpush2.msra.mxu0 0.0
    %93 = vmatprep.subr.mxu0 0.0
    %94 = vmatpush2.msra.mxu0 0.0
    %95 = vmatprep.subr.mxu0 0.0
    %96 = vmatpush2.msra.mxu0 0.0
    %97 = vmatprep.subr.mxu0 0.0
    %98 = vmatpush2.msra.mxu0 0.0
    %99 = vmatprep.mubr.f32.mxu0 0.0
    %100 = vmatmul.mubr.f32.gmra.mxu0 %v30
    %v101 = vpop.f32.mrf.mxu0
    %v102 = vadd.f32 %v26, %v101
    %v103 = vpop.f32.mrf.mxu0
    %104 = vmatprep.mubr.f32.mxu0 0.0
    %105 = vmatmul.mubr.f32.gmra.mxu0 %v33
    %v106 = vpop.f32.mrf.mxu0
    %v107 = vadd.f32 %v26, %v106
    %v108 = vpop.f32.mrf.mxu0
    %109 = vdwg.mxu0
    %v110 = vmul.f32 %v102, %v102
    %v111 = vmul.f32 %v107, %v107
    %vm112 = vcmask 130048
    %v113 = vsel %vm112, %v110, 0.0
    %114 = vadd.xlane.f32.xlu0 %v113
    %v115 = vpop.xlane.xlu0 %114
    %v116 = vsel %vm112, %v111, 0.0
    %117 = vadd.xlane.f32.xlu0 %v116
    %v118 = vpop.xlane.xlu0 %117
    %v119 = vmax.f32 %v115, 1e-24
    %v120 = vmax.f32 %v118, 1e-24
    %v121 = vrsqrt.pop %v119
    %v122 = vrsqrt.pop %v120
    %v123 = vmul.f32 %v102, %v121
    %v124 = vmul.f32 %v107, %v122
    %125 = vst.msk [vmem:[#allocation2] sm:$0xff] %vm112, %v123
    %126 = vst.msk [vmem:[#allocation2 + $0x8] sm:$0xff] %vm112, %v124
    // Predicated region
    $region14: #{tpu_custom_call.1} parent=1 // pred_check
      _
    $region15: #{tpu_custom_call.1} parent=1 // pred_check_branch
      %128 = sbr.rel (0) target = $region17
    $region16: #{tpu_custom_call.1} parent=1 // pred_region
      %s130 = ssub.s32 256, 256
      %131 = vsyncadd [#allocation3], %s130
      %s132 = sshll.u32 [#allocation2], 4
      %s133 = int_to_ptr.vmem [resolvable:$true] %s132
      %138 = dma.vmem_to_hbm [thread:$0]  %s133, 256, %s3, [#allocation3], 128, 128, 8
    $region17: #{tpu_custom_call.1} parent=1 // pred_fallthru
      _
    // Predicated region
    $region18: #{tpu_custom_call.1} parent=1 // pred_check
      _
    $region19: #{tpu_custom_call.1} parent=1 // pred_check_branch
      %140 = sbr.rel (0) target = $region21
    $region20: #{tpu_custom_call.1} parent=1 // pred_region
      %141 = dma.done [#allocation3], 256
    $region21: #{tpu_custom_call.1} parent=1 // pred_fallthru
      _
    %142 = vsyncpa [#allocation3], 1

</llo_original>
